<compile_context>
chip_gen: v5e
topology: v5e:2x2
jax: 0.10.0
libtpu: 0.0.40
codegen_flags: <defaults>
</compile_context>

<pallas_src>
import jax
import jax.numpy as jnp
from jax.experimental import pallas as pl
from jax.experimental.pallas import tpu as pltpu

LANE = 128       # lane quantum (last dim)
SUBLANE_BF16 = 16  # bf16 packs 2 rows/sublane -> keep row tiles multiple of 16


def _round_up(n, m):
    return ((n + m - 1) // m) * m


def mlp_kernel(x_ref, w1_ref, b1_ref, w2_ref, b2_ref, o_ref):
    # x_ref:  (tm, in_p)    f32   (cast to bf16 here, on the VPU)
    # w1_ref: (in_p, hid_p) bf16  b1_ref: (1, hid_p) f32
    # w2_ref: (hid_p, out_p) bf16 b2_ref: (1, out_p) f32
    # o_ref:  (tm, out_p)   f32
    x_bf = x_ref[...].astype(jnp.bfloat16)
    # fc1 + ReLU: bf16 MXU inputs, f32 accumulation, f32 bias.
    h = jnp.dot(x_bf, w1_ref[...], preferred_element_type=jnp.float32)
    h = jnp.maximum(h + b1_ref[...], 0.0)
    # fc2: feed hidden back to the MXU in bf16, accumulate f32.
    o = jnp.dot(h.astype(jnp.bfloat16), w2_ref[...],
                preferred_element_type=jnp.float32)
    o_ref[...] = (o + b2_ref[...]).astype(o_ref.dtype)


def prepare_mlp_params(w1, b1, w2, b2):
    """One-time parameter prep (call at parameter-load time, NOT per forward).

    w1: (hidden, in_dims), b1: (hidden,)   -- PyTorch nn.Linear layout
    w2: (out_dims, hidden), b2: (out_dims,)
    Returns lane-padded, transposed, bf16 weight matrices + f32 biases.
    """
    hidden, in_dims = w1.shape
    out_dims = w2.shape[0]
    in_p = _round_up(in_dims, LANE)
    hid_p = _round_up(hidden, LANE)
    out_p = _round_up(out_dims, LANE)

    w1_t = jnp.pad(jnp.asarray(w1, jnp.float32).T,
                   ((0, in_p - in_dims), (0, hid_p - hidden))).astype(jnp.bfloat16)
    w2_t = jnp.pad(jnp.asarray(w2, jnp.float32).T,
                   ((0, hid_p - hidden), (0, out_p - out_dims))).astype(jnp.bfloat16)
    b1_p = jnp.pad(jnp.asarray(b1, jnp.float32),
                   (0, hid_p - hidden)).reshape(1, hid_p)
    b2_p = jnp.pad(jnp.asarray(b2, jnp.float32),
                   (0, out_p - out_dims)).reshape(1, out_p)
    return dict(w1=w1_t, b1=b1_p, w2=w2_t, b2=b2_p,
                in_dims=in_dims, out_dims=out_dims)


def _pick_row_tile(b16):
    """Row-tile size: big enough to amortize per-step overhead (HBM-bound),
    but keep >= 2 grid steps for moderate batches (v7x has 2 TensorCores)."""
    if b16 <= 256:
        return b16
    if b16 <= 1024:
        return _round_up(pl.cdiv(b16, 2), SUBLANE_BF16)
    return 512


def naive_mlp_forward(x, params):
    """Forward of NaiveMLP.  x: (B, ...) f32; params from prepare_mlp_params."""
    B = x.shape[0]
    x2d = x.reshape(B, -1).astype(jnp.float32)    # == torch .view(B, -1)
    in_dims = params["in_dims"]
    out_dims = params["out_dims"]
    w1_t, b1_p, w2_t, b2_p = params["w1"], params["b1"], params["w2"], params["b2"]
    in_p, hid_p = w1_t.shape
    out_p = w2_t.shape[1]

    # Pad the feature dim only if not already lane-aligned (1024 is -> no copy).
    if in_p != in_dims:
        x2d = jnp.pad(x2d, ((0, 0), (0, in_p - in_dims)))

    b16 = _round_up(B, SUBLANE_BF16)
    tm = _pick_row_tile(b16)

    # Tiny batches: pad the handful of missing rows so the single block exactly
    # matches the array (negligible copy).  Larger batches: no pad -- rely on
    # the ragged last block (rows are independent; OOB reads are unused, OOB
    # writes discarded) instead of a full-array jnp.pad copy.
    b_rows = B
    if b16 <= 256 and B != b16:
        x2d = jnp.pad(x2d, ((0, b16 - B), (0, 0)))
        b_rows = b16
    grid = (pl.cdiv(b_rows, tm),)

    # Advisory cost hint so XLA can overlap this (HBM/DMA-bound) call.
    flops = 2 * b_rows * in_p * hid_p + 2 * b_rows * hid_p * out_p
    bytes_accessed = (b_rows * in_p * 4            # x (f32)
                      + w1_t.size * 2 + w2_t.size * 2
                      + b1_p.size * 4 + b2_p.size * 4
                      + b_rows * out_p * 4)        # output (f32)
    cost = pl.CostEstimate(flops=flops, transcendentals=0,
                           bytes_accessed=bytes_accessed)

    out_padded = pl.pallas_call(
        mlp_kernel,
        out_shape=jax.ShapeDtypeStruct((b_rows, out_p), jnp.float32),
        grid=grid,
        in_specs=[
            pl.BlockSpec((tm, in_p), lambda i: (i, 0)),      # x row tile (f32)
            pl.BlockSpec((in_p, hid_p), lambda i: (0, 0)),   # w1 resident (bf16)
            pl.BlockSpec((1, hid_p), lambda i: (0, 0)),      # b1 resident (f32)
            pl.BlockSpec((hid_p, out_p), lambda i: (0, 0)),  # w2 resident (bf16)
            pl.BlockSpec((1, out_p), lambda i: (0, 0)),      # b2 resident (f32)
        ],
        out_specs=pl.BlockSpec((tm, out_p), lambda i: (i, 0)),
        compiler_params=pltpu.CompilerParams(
            dimension_semantics=("parallel",)),
        cost_estimate=cost,
    )(x2d, w1_t, b1_p, w2_t, b2_p)

    # Slice the lane/row padding back off (view-level glue; fuses downstream).
    return out_padded[:B, :out_dims]


def reference_forward(x, w1, b1, w2, b2):
    B = x.shape[0]
    x2d = x.reshape(B, -1)
    h = jnp.maximum(x2d @ w1.T + b1, 0.0)
    return h @ w2.T + b2


if __name__ == "__main__":
    # Shapes consistent with the module: x = (2, 4, 16, 16) -> in_dims = 1024
    B, C, H, W = 2, 4, 16, 16
    in_dims = C * H * W
    dim_hidden = 100
    out_dims = 10

    key = jax.random.PRNGKey(0)
    kx, kw1, kb1, kw2, kb2 = jax.random.split(key, 5)

    x = jax.random.normal(kx, (B, C, H, W), dtype=jnp.float32)

    # Deterministic parameter init (uniform, roughly like PyTorch Linear init).
    bound1 = 1.0 / (in_dims ** 0.5)
    w1 = jax.random.uniform(kw1, (dim_hidden, in_dims), jnp.float32, -bound1, bound1)
    b1 = jax.random.uniform(kb1, (dim_hidden,), jnp.float32, -bound1, bound1)
    bound2 = 1.0 / (dim_hidden ** 0.5)
    w2 = jax.random.uniform(kw2, (out_dims, dim_hidden), jnp.float32, -bound2, bound2)
    b2 = jax.random.uniform(kb2, (out_dims,), jnp.float32, -bound2, bound2)

    # One-time parameter preparation (hoisted out of the per-call hot path).
    params = prepare_mlp_params(w1, b1, w2, b2)

    out = naive_mlp_forward(x, params)
    out = jax.block_until_ready(out)

    ref = reference_forward(x, w1, b1, w2, b2)
    assert out.shape == (B, out_dims)
    # bf16 MXU inputs (f32 accumulation) -> loosened tolerance vs f32 reference.
    assert jnp.allclose(out, ref, atol=5e-2, rtol=5e-2), "mismatch vs reference"

    print("KERNEL_OK")
</pallas_src>

<mosaic_0001>
module attributes {stable_mosaic.version = 11 : i64} {
  func.func @mlp_kernel(%arg0: i32, %arg1: memref<16x1024xf32, #tpu.memory_space<vmem>>, %arg2: memref<1024x128xbf16, #tpu.memory_space<vmem>>, %arg3: memref<1x128xf32, #tpu.memory_space<vmem>>, %arg4: memref<128x128xbf16, #tpu.memory_space<vmem>>, %arg5: memref<1x128xf32, #tpu.memory_space<vmem>>, %arg6: memref<16x128xf32, #tpu.memory_space<vmem>>) attributes {dimension_semantics = [#tpu.dimension_semantics<parallel>], iteration_bounds = array<i64: 1>, scalar_prefetch = 0 : i64, scratch_operands = 0 : i64, tpu.core_type = #tpu.core_type<tc>, window_params = [{transform_indices = @transform_0, window_bounds = array<i64: 16, 1024>}, {pipeline_mode = #tpu.pipeline_mode<synchronous>, transform_indices = @transform_1, window_bounds = array<i64: 1024, 128>}, {pipeline_mode = #tpu.pipeline_mode<synchronous>, transform_indices = @transform_2, window_bounds = array<i64: 1, 128>}, {pipeline_mode = #tpu.pipeline_mode<synchronous>, transform_indices = @transform_3, window_bounds = array<i64: 128, 128>}, {pipeline_mode = #tpu.pipeline_mode<synchronous>, transform_indices = @transform_4, window_bounds = array<i64: 1, 128>}, {transform_indices = @transform_5, window_bounds = array<i64: 16, 128>}]} {
    %c0 = arith.constant 0 : index
    %c0_0 = arith.constant 0 : index
    %0 = vector.load %arg1[%c0, %c0_0] : memref<16x1024xf32, #tpu.memory_space<vmem>>, vector<16x1024xf32>
    %1 = arith.truncf %0 : vector<16x1024xf32> to vector<16x1024xbf16>
    %c0_1 = arith.constant 0 : index
    %c0_2 = arith.constant 0 : index
    %2 = vector.load %arg2[%c0_1, %c0_2] : memref<1024x128xbf16, #tpu.memory_space<vmem>>, vector<1024x128xbf16>
    %cst = arith.constant dense<0.000000e+00> : vector<16x128xf32>
    %3 = tpu.matmul %1, %2, %cst {dimension_numbers = #tpu.dot_dimension_numbers<[1], [0], [0], [1], [0, 0, 1, 1], [], []>} : vector<16x1024xbf16>, vector<1024x128xbf16>, vector<16x128xf32> -> vector<16x128xf32>
    %c0_3 = arith.constant 0 : index
    %c0_4 = arith.constant 0 : index
    %4 = vector.load %arg3[%c0_3, %c0_4] : memref<1x128xf32, #tpu.memory_space<vmem>>, vector<1x128xf32>
    %5 = vector.broadcast %4 : vector<1x128xf32> to vector<16x128xf32>
    %6 = arith.addf %3, %5 : vector<16x128xf32>
    %cst_5 = arith.constant 0.000000e+00 : f32
    %7 = vector.broadcast %cst_5 : f32 to vector<16x128xf32>
    %8 = arith.maximumf %6, %7 : vector<16x128xf32>
    %9 = arith.truncf %8 : vector<16x128xf32> to vector<16x128xbf16>
    %c0_6 = arith.constant 0 : index
    %c0_7 = arith.constant 0 : index
    %10 = vector.load %arg4[%c0_6, %c0_7] : memref<128x128xbf16, #tpu.memory_space<vmem>>, vector<128x128xbf16>
    %cst_8 = arith.constant dense<0.000000e+00> : vector<16x128xf32>
    %11 = tpu.matmul %9, %10, %cst_8 {dimension_numbers = #tpu.dot_dimension_numbers<[1], [0], [0], [1], [0, 0, 1, 1], [], []>} : vector<16x128xbf16>, vector<128x128xbf16>, vector<16x128xf32> -> vector<16x128xf32>
    %c0_9 = arith.constant 0 : index
    %c0_10 = arith.constant 0 : index
    %12 = vector.load %arg5[%c0_9, %c0_10] : memref<1x128xf32, #tpu.memory_space<vmem>>, vector<1x128xf32>
    %13 = vector.broadcast %12 : vector<1x128xf32> to vector<16x128xf32>
    %14 = arith.addf %11, %13 : vector<16x128xf32>
    %c0_11 = arith.constant 0 : index
    %c0_12 = arith.constant 0 : index
    %15 = vector.load %arg6[%c0_11, %c0_12] : memref<16x128xf32, #tpu.memory_space<vmem>>, vector<16x128xf32>
    tpu.vector_store %arg6[%c0_11, %c0_12], %14 {strides = array<i32>} : memref<16x128xf32, #tpu.memory_space<vmem>>, vector<16x128xf32>,
    return
  }
  func.func @transform_0(%arg0: i32) -> (i32, i32) {
    %c0_i32 = arith.constant 0 : i32
    %c0_i32_0 = arith.constant 0 : i32
    return %arg0, %c0_i32 : i32, i32
  }
  func.func @transform_1(%arg0: i32) -> (i32, i32) {
    %c0_i32 = arith.constant 0 : i32
    %c0_i32_0 = arith.constant 0 : i32
    %c0_i32_1 = arith.constant 0 : i32
    return %c0_i32, %c0_i32_0 : i32, i32
  }
  func.func @transform_2(%arg0: i32) -> (i32, i32) {
    %c0_i32 = arith.constant 0 : i32
    %c0_i32_0 = arith.constant 0 : i32
    %c0_i32_1 = arith.constant 0 : i32
    return %c0_i32, %c0_i32_0 : i32, i32
  }
  func.func @transform_3(%arg0: i32) -> (i32, i32) {
    %c0_i32 = arith.constant 0 : i32
    %c0_i32_0 = arith.constant 0 : i32
    %c0_i32_1 = arith.constant 0 : i32
    return %c0_i32, %c0_i32_0 : i32, i32
  }
  func.func @transform_4(%arg0: i32) -> (i32, i32) {
    %c0_i32 = arith.constant 0 : i32
    %c0_i32_0 = arith.constant 0 : i32
    %c0_i32_1 = arith.constant 0 : i32
    return %c0_i32, %c0_i32_0 : i32, i32
  }
  func.func @transform_5(%arg0: i32) -> (i32, i32) {
    %c0_i32 = arith.constant 0 : i32
    %c0_i32_0 = arith.constant 0 : i32
    return %arg0, %c0_i32 : i32, i32
  }
}

</mosaic_0001>

<llo_original>
// kernel: tpu_custom_call.1
$region0: #{tpu_custom_call.1}
  #allocation0 [shape = 'u32[]', space=smem, size = 0x4, offset = 0x4, fixed_abs, tag = 'smem constant byte address 0x4 - core index']
  #allocation1 [shape = 'u32[72,128]{1,0:T(1,128)}', space=vmem, size = 0x9000, scoped, tag = 'internal scratch']
  %s0 = inlined_call_operand.hbm [shape: f32[16,1024], index: 0, kind: input, shape index: {}]
  %s1 = inlined_call_operand.hbm [shape: bf16[1024,128], index: 1, kind: input, shape index: {}]
  %s2 = inlined_call_operand.vmem [shape: f32[1,128], index: 2, kind: input, shape index: {}]
  %s3 = inlined_call_operand.hbm [shape: bf16[128,128], index: 3, kind: input, shape index: {}]
  %s4 = inlined_call_operand.vmem [shape: f32[1,128], index: 4, kind: input, shape index: {}]
  %s5 = inlined_call_operand.hbm [shape: f32[16,128], index: 5, kind: output, shape index: {}]
  %s6 = sld [smem:[#allocation0]]
  $region42: #{tpu_custom_call.1} parent=0
    _
  %s8 = ssub.s32 1, %s6
  %s9 = scalar_select 0, %s8, %s6
  $region1: #{tpu_custom_call.1} parent=0
    #allocation2 [shape = 'u8[65536]{0}', space=vmem, size = 0x10000, scoped, tag = 'input window, operand 0, single buffered']
    #allocation3 [shape = 's32[1]{0}', space=sflag, size = 0x4, scoped, tag = 'scoped memory for tpu_custom_call.1']
    #allocation4 [shape = 's32[1]{0}', space=sflag, size = 0x4, scoped, tag = 'scoped memory for tpu_custom_call.1']
    #allocation5 [shape = 'u8[262144]{0}', space=vmem, size = 0x40000, scoped, tag = 'input window, operand 1, single buffered']
    #allocation6 [shape = 's32[1]{0}', space=sflag, size = 0x4, scoped, tag = 'scoped memory for tpu_custom_call.1']
    #allocation7 [shape = 'u8[32768]{0}', space=vmem, size = 0x8000, scoped, tag = 'input window, operand 3, single buffered']
    #allocation8 [shape = 'u8[8192]{0}', space=vmem, size = 0x2000, scoped, tag = 'output window, operand 0, single buffered']
    %10 = vsyncpa [#allocation3], 0
    %11 = vsyncpa [#allocation6], 0
    %12 = vsyncpa [#allocation4], 0
    // Predicated region
    $region2: #{tpu_custom_call.1} parent=1 // pred_check
      _
    $region3: #{tpu_custom_call.1} parent=1 // pred_check_branch
      %14 = sbr.rel (0) target = $region5
    $region4: #{tpu_custom_call.1} parent=1 // pred_region
      %16 = vsyncadd [#allocation3], 0
      %s17 = sshll.u32 %s0, 4
      %s18 = int_to_ptr.hbm [resolvable:$true] %s17
      %s19 = sshll.u32 [#allocation2], 4
      %s20 = int_to_ptr.vmem [resolvable:$true] %s19
      %25 = dma.hbm_to_vmem [thread:$0]  %s18, 2048, %s20, [#allocation3], 1024, 1024, 64
    $region5: #{tpu_custom_call.1} parent=1 // pred_fallthru
      _
    // Predicated region
    $region6: #{tpu_custom_call.1} parent=1 // pred_check
      _
    $region7: #{tpu_custom_call.1} parent=1 // pred_check_branch
      %27 = sbr.rel (0) target = $region9
    $region8: #{tpu_custom_call.1} parent=1 // pred_region
      %29 = vsyncadd [#allocation6], 0
      %s30 = sshll.u32 %s1, 4
      %s31 = int_to_ptr.hbm [resolvable:$true] %s30
      %s32 = sshll.u32 [#allocation5], 4
      %s33 = int_to_ptr.vmem [resolvable:$true] %s32
      %38 = dma.hbm_to_vmem [thread:$0]  %s31, 8192, %s33, [#allocation6], 64, 64, 4
    $region9: #{tpu_custom_call.1} parent=1 // pred_fallthru
      _
    // Predicated region
    $region10: #{tpu_custom_call.1} parent=1 // pred_check
      _
    $region11: #{tpu_custom_call.1} parent=1 // pred_check_branch
      %40 = sbr.rel (0) target = $region13
    $region12: #{tpu_custom_call.1} parent=1 // pred_region
      _
    $region13: #{tpu_custom_call.1} parent=1 // pred_fallthru
      _
    // Predicated region
    $region14: #{tpu_custom_call.1} parent=1 // pred_check
      _
    $region15: #{tpu_custom_call.1} parent=1 // pred_check_branch
      %42 = sbr.rel (0) target = $region17
    $region16: #{tpu_custom_call.1} parent=1 // pred_region
      %44 = vsyncadd [#allocation6], 0
      %s45 = sshll.u32 %s3, 4
      %s46 = int_to_ptr.hbm [resolvable:$true] %s45
      %s47 = sshll.u32 [#allocation7], 4
      %s48 = int_to_ptr.vmem [resolvable:$true] %s47
      %53 = dma.hbm_to_vmem [thread:$0]  %s46, 1024, %s48, [#allocation6], 64, 64, 4
    $region17: #{tpu_custom_call.1} parent=1 // pred_fallthru
      _
    // Predicated region
    $region18: #{tpu_custom_call.1} parent=1 // pred_check
      _
    $region19: #{tpu_custom_call.1} parent=1 // pred_check_branch
      %55 = sbr.rel (0) target = $region21
    $region20: #{tpu_custom_call.1} parent=1 // pred_region
      _
    $region21: #{tpu_custom_call.1} parent=1 // pred_fallthru
      _
    // Predicated region
    $region22: #{tpu_custom_call.1} parent=1 // pred_check
      _
    $region23: #{tpu_custom_call.1} parent=1 // pred_check_branch
      %57 = sbr.rel (0) target = $region25
    $region24: #{tpu_custom_call.1} parent=1 // pred_region
      %59 = dma.done [#allocation3], 2048
    $region25: #{tpu_custom_call.1} parent=1 // pred_fallthru
      _
    // Predicated region
    $region26: #{tpu_custom_call.1} parent=1 // pred_check
      _
    $region27: #{tpu_custom_call.1} parent=1 // pred_check_branch
      %61 = sbr.rel (0) target = $region29
    $region28: #{tpu_custom_call.1} parent=1 // pred_region
      %63 = dma.done [#allocation6], 8192
    $region29: #{tpu_custom_call.1} parent=1 // pred_fallthru
      _
    // Predicated region
    $region30: #{tpu_custom_call.1} parent=1 // pred_check
      _
    $region31: #{tpu_custom_call.1} parent=1 // pred_check_branch
      %65 = sbr.rel (0) target = $region33
    $region32: #{tpu_custom_call.1} parent=1 // pred_region
      %67 = dma.done [#allocation6], 1024
    $region33: #{tpu_custom_call.1} parent=1 // pred_fallthru
      _
    %v68 = vld [vmem:[#allocation2] sm:$0xff]
    %v69 = vld [vmem:[#allocation2 + $0x8] sm:$0xff]
    %v70 = vld [vmem:[#allocation2 + $0x10] sm:$0xff]
    %v71 = vld [vmem:[#allocation2 + $0x18] sm:$0xff]
    %v72 = vld [vmem:[#allocation2 + $0x20] sm:$0xff]
    %v73 = vld [vmem:[#allocation2 + $0x28] sm:$0xff]
    %v74 = vld [vmem:[#allocation2 + $0x30] sm:$0xff]
    %v75 = vld [vmem:[#allocation2 + $0x38] sm:$0xff]
    %v76 = vld [vmem:[#allocation2 + $0x40] sm:$0xff]
    %v77 = vld [vmem:[#allocation2 + $0x48] sm:$0xff]
    %v78 = vld [vmem:[#allocation2 + $0x50] sm:$0xff]
    %v79 = vld [vmem:[#allocation2 + $0x58] sm:$0xff]
    %v80 = vld [vmem:[#allocation2 + $0x60] sm:$0xff]
    %v81 = vld [vmem:[#allocation2 + $0x68] sm:$0xff]
    %v82 = vld [vmem:[#allocation2 + $0x70] sm:$0xff]
    %v83 = vld [vmem:[#allocation2 + $0x78] sm:$0xff]
    %v84 = vpack.c.bf16 %v76, %v68
    %v85 = vpack.c.bf16 %v77, %v69
    %v86 = vpack.c.bf16 %v78, %v70
    %v87 = vpack.c.bf16 %v79, %v71
    %v88 = vpack.c.bf16 %v80, %v72
    %v89 = vpack.c.bf16 %v81, %v73
    %v90 = vpack.c.bf16 %v82, %v74
    %v91 = vpack.c.bf16 %v83, %v75
    %v92 = vld [vmem:[#allocation5] sm:$0xf]
    %v93 = vld [vmem:[#allocation5 + $0x4] sm:$0xf]
    %v94 = vld [vmem:[#allocation5 + $0x8] sm:$0xf]
    %v95 = vld [vmem:[#allocation5 + $0xc] sm:$0xf]
    %v96 = vld [vmem:[#allocation5 + $0x10] sm:$0xf]
    %v97 = vld [vmem:[#allocation5 + $0x14] sm:$0xf]
    %v98 = vld [vmem:[#allocation5 + $0x18] sm:$0xf]
    %v99 = vld [vmem:[#allocation5 + $0x1c] sm:$0xf]
    %v100 = vld [vmem:[#allocation5 + $0x20] sm:$0xf]
    %v101 = vld [vmem:[#allocation5 + $0x24] sm:$0xf]
    %v102 = vld [vmem:[#allocation5 + $0x28] sm:$0xf]
    %v103 = vld [vmem:[#allocation5 + $0x2c] sm:$0xf]
    %v104 = vld [vmem:[#allocation5 + $0x30] sm:$0xf]
    %v105 = vld [vmem:[#allocation5 + $0x34] sm:$0xf]
    %v106 = vld [vmem:[#allocation5 + $0x38] sm:$0xf]
    %v107 = vld [vmem:[#allocation5 + $0x3c] sm:$0xf]
    %v108 = vld [vmem:[#allocation5 + $0x40] sm:$0xf]
    %v109 = vld [vmem:[#allocation5 + $0x44] sm:$0xf]
    %v110 = vld [vmem:[#allocation5 + $0x48] sm:$0xf]
    %v111 = vld [vmem:[#allocation5 + $0x4c] sm:$0xf]
    %v112 = vld [vmem:[#allocation5 + $0x50] sm:$0xf]
    %v113 = vld [vmem:[#allocation5 + $0x54] sm:$0xf]
    %v114 = vld [vmem:[#allocation5 + $0x58] sm:$0xf]
    %v115 = vld [vmem:[#allocation5 + $0x5c] sm:$0xf]
    %v116 = vld [vmem:[#allocation5 + $0x60] sm:$0xf]
    %v117 = vld [vmem:[#allocation5 + $0x64] sm:$0xf]
    %v118 = vld [vmem:[#allocation5 + $0x68] sm:$0xf]
    %v119 = vld [vmem:[#allocation5 + $0x6c] sm:$0xf]
    %v120 = vld [vmem:[#allocation5 + $0x70] sm:$0xf]
    %v121 = vld [vmem:[#allocation5 + $0x74] sm:$0xf]
    %v122 = vld [vmem:[#allocation5 + $0x78] sm:$0xf]
    %v123 = vld [vmem:[#allocation5 + $0x7c] sm:$0xf]
    %v124 = vld [vmem:[#allocation5 + $0x80] sm:$0xf]
    %v125 = vld [vmem:[#allocation5 + $0x84] sm:$0xf]
    %v126 = vld [vmem:[#allocation5 + $0x88] sm:$0xf]
    %v127 = vld [vmem:[#allocation5 + $0x8c] sm:$0xf]
    %v128 = vld [vmem:[#allocation5 + $0x90] sm:$0xf]
    %v129 = vld [vmem:[#allocation5 + $0x94] sm:$0xf]
    %v130 = vld [vmem:[#allocation5 + $0x98] sm:$0xf]
    %v131 = vld [vmem:[#allocation5 + $0x9c] sm:$0xf]
    %v132 = vld [vmem:[#allocation5 + $0xa0] sm:$0xf]
    %v133 = vld [vmem:[#allocation5 + $0xa4] sm:$0xf]
    %v134 = vld [vmem:[#allocation5 + $0xa8] sm:$0xf]
    %v135 = vld [vmem:[#allocation5 + $0xac] sm:$0xf]
    %v136 = vld [vmem:[#allocation5 + $0xb0] sm:$0xf]
    %v137 = vld [vmem:[#allocation5 + $0xb4] sm:$0xf]
    %v138 = vld [vmem:[#allocation5 + $0xb8] sm:$0xf]
    %v139 = vld [vmem:[#allocation5 + $0xbc] sm:$0xf]
    %v140 = vld [vmem:[#allocation5 + $0xc0] sm:$0xf]
    %v141 = vld [vmem:[#allocation5 + $0xc4] sm:$0xf]
    %v142 = vld [vmem:[#allocation5 + $0xc8] sm:$0xf]
    %v143 = vld [vmem:[#allocation5 + $0xcc] sm:$0xf]
    %v144 = vld [vmem:[#allocation5 + $0xd0] sm:$0xf]
    %v145 = vld [vmem:[#allocation5 + $0xd4] sm:$0xf]
    %v146 = vld [vmem:[#allocation5 + $0xd8] sm:$0xf]
    %v147 = vld [vmem:[#allocation5 + $0xdc] sm:$0xf]
    %v148 = vld [vmem:[#allocation5 + $0xe0] sm:$0xf]
    %v149 = vld [vmem:[#allocation5 + $0xe4] sm:$0xf]
    %v150 = vld [vmem:[#allocation5 + $0xe8] sm:$0xf]
    %v151 = vld [vmem:[#allocation5 + $0xec] sm:$0xf]
    %v152 = vld [vmem:[#allocation5 + $0xf0] sm:$0xf]
    %v153 = vld [vmem:[#allocation5 + $0xf4] sm:$0xf]
    %v154 = vld [vmem:[#allocation5 + $0xf8] sm:$0xf]
    %v155 = vld [vmem:[#allocation5 + $0xfc] sm:$0xf]
    %v156 = vld [vmem:[#allocation5 + $0x100] sm:$0xf]
    %v157 = vld [vmem:[#allocation5 + $0x104] sm:$0xf]
    %v158 = vld [vmem:[#allocation5 + $0x108] sm:$0xf]
    %v159 = vld [vmem:[#allocation5 + $0x10c] sm:$0xf]
    %v160 = vld [vmem:[#allocation5 + $0x110] sm:$0xf]
    %v161 = vld [vmem:[#allocation5 + $0x114] sm:$0xf]
    %v162 = vld [vmem:[#allocation5 + $0x118] sm:$0xf]
    %v163 = vld [vmem:[#allocation5 + $0x11c] sm:$0xf]
    %v164 = vld [vmem:[#allocation5 + $0x120] sm:$0xf]
    %v165 = vld [vmem:[#allocation5 + $0x124] sm:$0xf]
    %v166 = vld [vmem:[#allocation5 + $0x128] sm:$0xf]
    %v167 = vld [vmem:[#allocation5 + $0x12c] sm:$0xf]
    %v168 = vld [vmem:[#allocation5 + $0x130] sm:$0xf]
    %v169 = vld [vmem:[#allocation5 + $0x134] sm:$0xf]
    %v170 = vld [vmem:[#allocation5 + $0x138] sm:$0xf]
    %v171 = vld [vmem:[#allocation5 + $0x13c] sm:$0xf]
    %v172 = vld [vmem:[#allocation5 + $0x140] sm:$0xf]
    %v173 = vld [vmem:[#allocation5 + $0x144] sm:$0xf]
    %v174 = vld [vmem:[#allocation5 + $0x148] sm:$0xf]
    %v175 = vld [vmem:[#allocation5 + $0x14c] sm:$0xf]
    %v176 = vld [vmem:[#allocation5 + $0x150] sm:$0xf]
    %v177 = vld [vmem:[#allocation5 + $0x154] sm:$0xf]
    %v178 = vld [vmem:[#allocation5 + $0x158] sm:$0xf]
    %v179 = vld [vmem:[#allocation5 + $0x15c] sm:$0xf]
    %v180 = vld [vmem:[#allocation5 + $0x160] sm:$0xf]
    %v181 = vld [vmem:[#allocation5 + $0x164] sm:$0xf]
    %v182 = vld [vmem:[#allocation5 + $0x168] sm:$0xf]
    %v183 = vld [vmem:[#allocation5 + $0x16c] sm:$0xf]
    %v184 = vld [vmem:[#allocation5 + $0x170] sm:$0xf]
    %v185 = vld [vmem:[#allocation5 + $0x174] sm:$0xf]
    %v186 = vld [vmem:[#allocation5 + $0x178] sm:$0xf]
    %v187 = vld [vmem:[#allocation5 + $0x17c] sm:$0xf]
    %v188 = vld [vmem:[#allocation5 + $0x180] sm:$0xf]
    %v189 = vld [vmem:[#allocation5 + $0x184] sm:$0xf]
    %v190 = vld [vmem:[#allocation5 + $0x188] sm:$0xf]
    %v191 = vld [vmem:[#allocation5 + $0x18c] sm:$0xf]
    %v192 = vld [vmem:[#allocation5 + $0x190] sm:$0xf]
    %v193 = vld [vmem:[#allocation5 + $0x194] sm:$0xf]
    %v194 = vld [vmem:[#allocation5 + $0x198] sm:$0xf]
    %v195 = vld [vmem:[#allocation5 + $0x19c] sm:$0xf]
    %v196 = vld [vmem:[#allocation5 + $0x1a0] sm:$0xf]
    %v197 = vld [vmem:[#allocation5 + $0x1a4] sm:$0xf]
    %v198 = vld [vmem:[#allocation5 + $0x1a8] sm:$0xf]
    %v199 = vld [vmem:[#allocation5 + $0x1ac] sm:$0xf]
    %v200 = vld [vmem:[#allocation5 + $0x1b0] sm:$0xf]
    %v201 = vld [vmem:[#allocation5 + $0x1b4] sm:$0xf]
    %v202 = vld [vmem:[#allocation5 + $0x1b8] sm:$0xf]
    %v203 = vld [vmem:[#allocation5 + $0x1bc] sm:$0xf]
    %v204 = vld [vmem:[#allocation5 + $0x1c0] sm:$0xf]
    %v205 = vld [vmem:[#allocation5 + $0x1c4] sm:$0xf]
    %v206 = vld [vmem:[#allocation5 + $0x1c8] sm:$0xf]
    %v207 = vld [vmem:[#allocation5 + $0x1cc] sm:$0xf]
    %v208 = vld [vmem:[#allocation5 + $0x1d0] sm:$0xf]
    %v209 = vld [vmem:[#allocation5 + $0x1d4] sm:$0xf]
    %v210 = vld [vmem:[#allocation5 + $0x1d8] sm:$0xf]
    %v211 = vld [vmem:[#allocation5 + $0x1dc] sm:$0xf]
    %v212 = vld [vmem:[#allocation5 + $0x1e0] sm:$0xf]
    %v213 = vld [vmem:[#allocation5 + $0x1e4] sm:$0xf]
    %v214 = vld [vmem:[#allocation5 + $0x1e8] sm:$0xf]
    %v215 = vld [vmem:[#allocation5 + $0x1ec] sm:$0xf]
    %v216 = vld [vmem:[#allocation5 + $0x1f0] sm:$0xf]
    %v217 = vld [vmem:[#allocation5 + $0x1f4] sm:$0xf]
    %v218 = vld [vmem:[#allocation5 + $0x1f8] sm:$0xf]
    %v219 = vld [vmem:[#allocation5 + $0x1fc] sm:$0xf]
    %v220 = vld [vmem:[%s2] sm:$0x1]
    %v222 = vperm.slane %v220, 0
    %v352 = vunpack.c.l.b16 %v92
    %v353 = vunpack.c.l.b16 %v93
    %v354 = vunpack.c.l.b16 %v94
    %v355 = vunpack.c.l.b16 %v95
    %v356 = vunpack.c.l.b16 %v96
    %v357 = vunpack.c.l.b16 %v97
    %v358 = vunpack.c.l.b16 %v98
    %v359 = vunpack.c.l.b16 %v99
    %v360 = vunpack.c.l.b16 %v100
    %v361 = vunpack.c.l.b16 %v101
    %v362 = vunpack.c.l.b16 %v102
    %v363 = vunpack.c.l.b16 %v103
    %v364 = vunpack.c.l.b16 %v104
    %v365 = vunpack.c.l.b16 %v105
    %v366 = vunpack.c.l.b16 %v106
    %v367 = vunpack.c.l.b16 %v107
    %v368 = vunpack.c.l.b16 %v108
    %v369 = vunpack.c.l.b16 %v109
    %v370 = vunpack.c.l.b16 %v110
    %v371 = vunpack.c.l.b16 %v111
    %v372 = vunpack.c.l.b16 %v112
    %v373 = vunpack.c.l.b16 %v113
    %v374 = vunpack.c.l.b16 %v114
    %v375 = vunpack.c.l.b16 %v115
    %v376 = vunpack.c.l.b16 %v116
    %v377 = vunpack.c.l.b16 %v117
    %v378 = vunpack.c.l.b16 %v118
    %v379 = vunpack.c.l.b16 %v119
    %v380 = vunpack.c.l.b16 %v120
    %v381 = vunpack.c.l.b16 %v121
    %v382 = vunpack.c.l.b16 %v122
    %v383 = vunpack.c.l.b16 %v123
    %v384 = vunpack.c.l.b16 %v124
    %v385 = vunpack.c.l.b16 %v125
    %v386 = vunpack.c.l.b16 %v126
    %v387 = vunpack.c.l.b16 %v127
    %v388 = vunpack.c.l.b16 %v128
    %v389 = vunpack.c.l.b16 %v129
    %v390 = vunpack.c.l.b16 %v130
    %v391 = vunpack.c.l.b16 %v131
    %v392 = vunpack.c.l.b16 %v132
    %v393 = vunpack.c.l.b16 %v133
    %v394 = vunpack.c.l.b16 %v134
    %v395 = vunpack.c.l.b16 %v135
    %v396 = vunpack.c.l.b16 %v136
    %v397 = vunpack.c.l.b16 %v137
    %v398 = vunpack.c.l.b16 %v138
    %v399 = vunpack.c.l.b16 %v139
    %v400 = vunpack.c.l.b16 %v140
    %v401 = vunpack.c.l.b16 %v141
    %v402 = vunpack.c.l.b16 %v142
    %v403 = vunpack.c.l.b16 %v143
    %v404 = vunpack.c.l.b16 %v144
    %v405 = vunpack.c.l.b16 %v145
    %v406 = vunpack.c.l.b16 %v146
    %v407 = vunpack.c.l.b16 %v147
    %v408 = vunpack.c.l.b16 %v148
    %v409 = vunpack.c.l.b16 %v149
    %v410 = vunpack.c.l.b16 %v150
    %v411 = vunpack.c.l.b16 %v151
    %v412 = vunpack.c.l.b16 %v152
    %v413 = vunpack.c.l.b16 %v153
    %v414 = vunpack.c.l.b16 %v154
    %v415 = vunpack.c.l.b16 %v155
    %v416 = vunpack.c.l.b16 %v156
    %v417 = vunpack.c.l.b16 %v157
    %v418 = vunpack.c.l.b16 %v158
    %v419 = vunpack.c.l.b16 %v159
    %v420 = vunpack.c.l.b16 %v160
    %v421 = vunpack.c.l.b16 %v161
    %v422 = vunpack.c.l.b16 %v162
    %v423 = vunpack.c.l.b16 %v163
    %v424 = vunpack.c.l.b16 %v164
    %v425 = vunpack.c.l.b16 %v165
    %v426 = vunpack.c.l.b16 %v166
    %v427 = vunpack.c.l.b16 %v167
    %v428 = vunpack.c.l.b16 %v168
    %v429 = vunpack.c.l.b16 %v169
    %v430 = vunpack.c.l.b16 %v170
    %v431 = vunpack.c.l.b16 %v171
    %v432 = vunpack.c.l.b16 %v172
    %v433 = vunpack.c.l.b16 %v173
    %v434 = vunpack.c.l.b16 %v174
    %v435 = vunpack.c.l.b16 %v175
    %v436 = vunpack.c.l.b16 %v176
    %v437 = vunpack.c.l.b16 %v177
    %v438 = vunpack.c.l.b16 %v178
    %v439 = vunpack.c.l.b16 %v179
    %v440 = vunpack.c.l.b16 %v180
    %v441 = vunpack.c.l.b16 %v181
    %v442 = vunpack.c.l.b16 %v182
    %v443 = vunpack.c.l.b16 %v183
    %v444 = vunpack.c.l.b16 %v184
    %v445 = vunpack.c.l.b16 %v185
    %v446 = vunpack.c.l.b16 %v186
    %v447 = vunpack.c.l.b16 %v187
    %v448 = vunpack.c.l.b16 %v188
    %v449 = vunpack.c.l.b16 %v189
    %v450 = vunpack.c.l.b16 %v190
    %v451 = vunpack.c.l.b16 %v191
    %v452 = vunpack.c.l.b16 %v192
    %v453 = vunpack.c.l.b16 %v193
    %v454 = vunpack.c.l.b16 %v194
    %v455 = vunpack.c.l.b16 %v195
    %v456 = vunpack.c.l.b16 %v196
    %v457 = vunpack.c.l.b16 %v197
    %v458 = vunpack.c.l.b16 %v198
    %v459 = vunpack.c.l.b16 %v199
    %v460 = vunpack.c.l.b16 %v200
    %v461 = vunpack.c.l.b16 %v201
    %v462 = vunpack.c.l.b16 %v202
    %v463 = vunpack.c.l.b16 %v203
    %v464 = vunpack.c.l.b16 %v204
    %v465 = vunpack.c.l.b16 %v205
    %v466 = vunpack.c.l.b16 %v206
    %v467 = vunpack.c.l.b16 %v207
    %v468 = vunpack.c.l.b16 %v208
    %v469 = vunpack.c.l.b16 %v209
    %v470 = vunpack.c.l.b16 %v210
    %v471 = vunpack.c.l.b16 %v211
    %v472 = vunpack.c.l.b16 %v212
    %v473 = vunpack.c.l.b16 %v213
    %v474 = vunpack.c.l.b16 %v214
    %v475 = vunpack.c.l.b16 %v215
    %v476 = vunpack.c.l.b16 %v216
    %v477 = vunpack.c.l.b16 %v217
    %v478 = vunpack.c.l.b16 %v218
    %v479 = vunpack.c.l.b16 %v219
    %v480 = vpack.c.b16 %v353, %v352
    %v481 = vpack.c.b16 %v355, %v354
    %v482 = vpack.c.b16 %v357, %v356
    %v483 = vpack.c.b16 %v359, %v358
    %v484 = vpack.c.b16 %v361, %v360
    %v485 = vpack.c.b16 %v363, %v362
    %v486 = vpack.c.b16 %v365, %v364
    %v487 = vpack.c.b16 %v367, %v366
    %v488 = vpack.c.b16 %v369, %v368
    %v489 = vpack.c.b16 %v371, %v370
    %v490 = vpack.c.b16 %v373, %v372
    %v491 = vpack.c.b16 %v375, %v374
    %v492 = vpack.c.b16 %v377, %v376
    %v493 = vpack.c.b16 %v379, %v378
    %v494 = vpack.c.b16 %v381, %v380
    %v495 = vpack.c.b16 %v383, %v382
    %v496 = vpack.c.b16 %v385, %v384
    %v497 = vpack.c.b16 %v387, %v386
    %v498 = vpack.c.b16 %v389, %v388
    %v499 = vpack.c.b16 %v391, %v390
    %v500 = vpack.c.b16 %v393, %v392
    %v501 = vpack.c.b16 %v395, %v394
    %v502 = vpack.c.b16 %v397, %v396
    %v503 = vpack.c.b16 %v399, %v398
    %v504 = vpack.c.b16 %v401, %v400
    %v505 = vpack.c.b16 %v403, %v402
    %v506 = vpack.c.b16 %v405, %v404
    %v507 = vpack.c.b16 %v407, %v406
    %v508 = vpack.c.b16 %v409, %v408
    %v509 = vpack.c.b16 %v411, %v410
    %v510 = vpack.c.b16 %v413, %v412
    %v511 = vpack.c.b16 %v415, %v414
    %v512 = vpack.c.b16 %v417, %v416
    %v513 = vpack.c.b16 %v419, %v418
    %v514 = vpack.c.b16 %v421, %v420
    %v515 = vpack.c.b16 %v423, %v422
    %v516 = vpack.c.b16 %v425, %v424
    %v517 = vpack.c.b16 %v427, %v426
    %v518 = vpack.c.b16 %v429, %v428
    %v519 = vpack.c.b16 %v431, %v430
    %v520 = vpack.c.b16 %v433, %v432
    %v521 = vpack.c.b16 %v435, %v434
    %v522 = vpack.c.b16 %v437, %v436
    %v523 = vpack.c.b16 %v439, %v438
    %v524 = vpack.c.b16 %v441, %v440
    %v525 = vpack.c.b16 %v443, %v442
    %v526 = vpack.c.b16 %v445, %v444
    %v527 = vpack.c.b16 %v447, %v446
    %v528 = vpack.c.b16 %v449, %v448
    %v529 = vpack.c.b16 %v451, %v450
    %v530 = vpack.c.b16 %v453, %v452
    %v531 = vpack.c.b16 %v455, %v454
    %v532 = vpack.c.b16 %v457, %v456
    %v533 = vpack.c.b16 %v459, %v458
    %v534 = vpack.c.b16 %v461, %v460
    %v535 = vpack.c.b16 %v463, %v462
    %v536 = vpack.c.b16 %v465, %v464
    %v537 = vpack.c.b16 %v467, %v466
    %v538 = vpack.c.b16 %v469, %v468
    %v539 = vpack.c.b16 %v471, %v470
    %v540 = vpack.c.b16 %v473, %v472
    %v541 = vpack.c.b16 %v475, %v474
    %v542 = vpack.c.b16 %v477, %v476
    %v543 = vpack.c.b16 %v479, %v478
    %608 = vmatpush.bf16.msra.mxu0 %v487
    %609 = vmatpush.bf16.msra.mxu0 %v486
    %610 = vmatpush.bf16.msra.mxu0 %v485
    %611 = vmatpush.bf16.msra.mxu0 %v484
    %612 = vmatpush.bf16.msra.mxu0 %v483
    %613 = vmatpush.bf16.msra.mxu0 %v482
    %614 = vmatpush.bf16.msra.mxu0 %v481
    %615 = vmatpush.bf16.msra.mxu0 %v480
    %616 = vmatmul.bf16.gmra.mxu0 %v84
    %v617 = vpop.f32.mrf.mxu0
    %v618 = vadd.f32 %v222, %v617
    %v619 = vpop.f32.mrf.mxu0
    %v620 = vadd.f32 %v222, %v619
    %621 = vdwg.mxu0
    %622 = vmatpush.bf16.msra.mxu0 %v495
    %623 = vmatpush.bf16.msra.mxu0 %v494
    %624 = vmatpush.bf16.msra.mxu0 %v493
    %625 = vmatpush.bf16.msra.mxu0 %v492
    %626 = vmatpush.bf16.msra.mxu0 %v491
    %627 = vmatpush.bf16.msra.mxu0 %v490
    %628 = vmatpush.bf16.msra.mxu0 %v489
    %629 = vmatpush.bf16.msra.mxu0 %v488
    %630 = vmatmul.bf16.gmra.mxu0 %v85
    %v631 = vpop.f32.mrf.mxu0
    %v632 = vadd.f32 %v618, %v631
    %v633 = vpop.f32.mrf.mxu0
    %v634 = vadd.f32 %v620, %v633
    %635 = vdwg.mxu0
    %636 = vmatpush.bf16.msra.mxu0 %v503
    %637 = vmatpush.bf16.msra.mxu0 %v502
    %638 = vmatpush.bf16.msra.mxu0 %v501
    %639 = vmatpush.bf16.msra.mxu0 %v500
    %640 = vmatpush.bf16.msra.mxu0 %v499
    %641 = vmatpush.bf16.msra.mxu0 %v498
    %642 = vmatpush.bf16.msra.mxu0 %v497
    %643 = vmatpush.bf16.msra.mxu0 %v496
    %644 = vmatmul.bf16.gmra.mxu0 %v86
    %v645 = vpop.f32.mrf.mxu0
    %v646 = vadd.f32 %v632, %v645
    %v647 = vpop.f32.mrf.mxu0
    %v648 = vadd.f32 %v634, %v647
    %649 = vdwg.mxu0
    %650 = vmatpush.bf16.msra.mxu0 %v511
    %651 = vmatpush.bf16.msra.mxu0 %v510
    %652 = vmatpush.bf16.msra.mxu0 %v509
    %653 = vmatpush.bf16.msra.mxu0 %v508
    %654 = vmatpush.bf16.msra.mxu0 %v507
    %655 = vmatpush.bf16.msra.mxu0 %v506
    %656 = vmatpush.bf16.msra.mxu0 %v505
    %657 = vmatpush.bf16.msra.mxu0 %v504
    %658 = vmatmul.bf16.gmra.mxu0 %v87
    %v659 = vpop.f32.mrf.mxu0
    %v660 = vadd.f32 %v646, %v659
    %v661 = vpop.f32.mrf.mxu0
    %v662 = vadd.f32 %v648, %v661
    %663 = vdwg.mxu0
    %664 = vmatpush.bf16.msra.mxu0 %v519
    %665 = vmatpush.bf16.msra.mxu0 %v518
    %666 = vmatpush.bf16.msra.mxu0 %v517
    %667 = vmatpush.bf16.msra.mxu0 %v516
    %668 = vmatpush.bf16.msra.mxu0 %v515
    %669 = vmatpush.bf16.msra.mxu0 %v514
    %670 = vmatpush.bf16.msra.mxu0 %v513
    %671 = vmatpush.bf16.msra.mxu0 %v512
    %672 = vmatmul.bf16.gmra.mxu0 %v88
    %v673 = vpop.f32.mrf.mxu0
    %v674 = vadd.f32 %v660, %v673
    %v675 = vpop.f32.mrf.mxu0
    %v676 = vadd.f32 %v662, %v675
    %677 = vdwg.mxu0
    %678 = vmatpush.bf16.msra.mxu0 %v527
    %679 = vmatpush.bf16.msra.mxu0 %v526
    %680 = vmatpush.bf16.msra.mxu0 %v525
    %681 = vmatpush.bf16.msra.mxu0 %v524
    %682 = vmatpush.bf16.msra.mxu0 %v523
    %683 = vmatpush.bf16.msra.mxu0 %v522
    %684 = vmatpush.bf16.msra.mxu0 %v521
    %685 = vmatpush.bf16.msra.mxu0 %v520
    %686 = vmatmul.bf16.gmra.mxu0 %v89
    %v687 = vpop.f32.mrf.mxu0
    %v688 = vadd.f32 %v674, %v687
    %v689 = vpop.f32.mrf.mxu0
    %v690 = vadd.f32 %v676, %v689
    %691 = vdwg.mxu0
    %692 = vmatpush.bf16.msra.mxu0 %v535
    %693 = vmatpush.bf16.msra.mxu0 %v534
    %694 = vmatpush.bf16.msra.mxu0 %v533
    %695 = vmatpush.bf16.msra.mxu0 %v532
    %696 = vmatpush.bf16.msra.mxu0 %v531
    %697 = vmatpush.bf16.msra.mxu0 %v530
    %698 = vmatpush.bf16.msra.mxu0 %v529
    %699 = vmatpush.bf16.msra.mxu0 %v528
    %700 = vmatmul.bf16.gmra.mxu0 %v90
    %v701 = vpop.f32.mrf.mxu0
    %v702 = vadd.f32 %v688, %v701
    %v703 = vpop.f32.mrf.mxu0
    %v704 = vadd.f32 %v690, %v703
    %705 = vdwg.mxu0
    %706 = vmatpush.bf16.msra.mxu0 %v543
    %707 = vmatpush.bf16.msra.mxu0 %v542
    %708 = vmatpush.bf16.msra.mxu0 %v541
    %709 = vmatpush.bf16.msra.mxu0 %v540
    %710 = vmatpush.bf16.msra.mxu0 %v539
    %711 = vmatpush.bf16.msra.mxu0 %v538
    %712 = vmatpush.bf16.msra.mxu0 %v537
    %713 = vmatpush.bf16.msra.mxu0 %v536
    %714 = vmatmul.bf16.gmra.mxu0 %v91
    %v715 = vpop.f32.mrf.mxu0
    %v716 = vadd.f32 %v702, %v715
    %v717 = vpop.f32.mrf.mxu0
    %v718 = vadd.f32 %v704, %v717
    %719 = vdwg.mxu0
    %v720 = vmax.f32 %v716, 0.0
    %v721 = vmax.f32 %v718, 0.0
    %v722 = vpack.c.bf16 %v721, %v720
    %v723 = vld [vmem:[#allocation7] sm:$0xf]
    %v724 = vld [vmem:[#allocation7 + $0x4] sm:$0xf]
    %v725 = vld [vmem:[#allocation7 + $0x8] sm:$0xf]
    %v726 = vld [vmem:[#allocation7 + $0xc] sm:$0xf]
    %v727 = vld [vmem:[#allocation7 + $0x10] sm:$0xf]
    %v728 = vld [vmem:[#allocation7 + $0x14] sm:$0xf]
    %v729 = vld [vmem:[#allocation7 + $0x18] sm:$0xf]
    %v730 = vld [vmem:[#allocation7 + $0x1c] sm:$0xf]
    %v731 = vld [vmem:[#allocation7 + $0x20] sm:$0xf]
    %v732 = vld [vmem:[#allocation7 + $0x24] sm:$0xf]
    %v733 = vld [vmem:[#allocation7 + $0x28] sm:$0xf]
    %v734 = vld [vmem:[#allocation7 + $0x2c] sm:$0xf]
    %v735 = vld [vmem:[#allocation7 + $0x30] sm:$0xf]
    %v736 = vld [vmem:[#allocation7 + $0x34] sm:$0xf]
    %v737 = vld [vmem:[#allocation7 + $0x38] sm:$0xf]
    %v738 = vld [vmem:[#allocation7 + $0x3c] sm:$0xf]
    %v739 = vld [vmem:[%s4] sm:$0x1]
    %v741 = vperm.slane %v739, 0
    %v759 = vunpack.c.l.b16 %v723
    %v760 = vunpack.c.l.b16 %v724
    %v761 = vunpack.c.l.b16 %v725
    %v762 = vunpack.c.l.b16 %v726
    %v763 = vunpack.c.l.b16 %v727
    %v764 = vunpack.c.l.b16 %v728
    %v765 = vunpack.c.l.b16 %v729
    %v766 = vunpack.c.l.b16 %v730
    %v767 = vunpack.c.l.b16 %v731
    %v768 = vunpack.c.l.b16 %v732
    %v769 = vunpack.c.l.b16 %v733
    %v770 = vunpack.c.l.b16 %v734
    %v771 = vunpack.c.l.b16 %v735
    %v772 = vunpack.c.l.b16 %v736
    %v773 = vunpack.c.l.b16 %v737
    %v774 = vunpack.c.l.b16 %v738
    %v775 = vpack.c.b16 %v760, %v759
    %v776 = vpack.c.b16 %v762, %v761
    %v777 = vpack.c.b16 %v764, %v763
    %v778 = vpack.c.b16 %v766, %v765
    %v779 = vpack.c.b16 %v768, %v767
    %v780 = vpack.c.b16 %v770, %v769
    %v781 = vpack.c.b16 %v772, %v771
    %v782 = vpack.c.b16 %v774, %v773
    %791 = vmatpush.bf16.msra.mxu0 %v782
    %792 = vmatpush.bf16.msra.mxu0 %v781
    %793 = vmatpush.bf16.msra.mxu0 %v780
    %794 = vmatpush.bf16.msra.mxu0 %v779
    %795 = vmatpush.bf16.msra.mxu0 %v778
    %796 = vmatpush.bf16.msra.mxu0 %v777
    %797 = vmatpush.bf16.msra.mxu0 %v776
    %798 = vmatpush.bf16.msra.mxu0 %v775
    %799 = vmatmul.bf16.gmra.mxu0 %v722
    %v800 = vpop.f32.mrf.mxu0
    %v801 = vadd.f32 %v741, %v800
    %v802 = vpop.f32.mrf.mxu0
    %v803 = vadd.f32 %v741, %v802
    %804 = vdwg.mxu0
    %805 = vst [vmem:[#allocation8] sm:$0xff] %v801
    %806 = vst [vmem:[#allocation8 + $0x8] sm:$0xff] %v803
    // Predicated region
    $region34: #{tpu_custom_call.1} parent=1 // pred_check
      _
    $region35: #{tpu_custom_call.1} parent=1 // pred_check_branch
      %808 = sbr.rel (0) target = $region37
    $region36: #{tpu_custom_call.1} parent=1 // pred_region
      %810 = vsyncadd [#allocation4], 0
      %s811 = sshll.u32 [#allocation8], 4
      %s812 = int_to_ptr.vmem [resolvable:$true] %s811
      %s813 = sshll.u32 %s5, 4
      %s814 = int_to_ptr.hbm [resolvable:$true] %s813
      %819 = dma.vmem_to_hbm [thread:$0]  %s812, 256, %s814, [#allocation4], 128, 128, 8
    $region37: #{tpu_custom_call.1} parent=1 // pred_fallthru
      _
    // Predicated region
    $region38: #{tpu_custom_call.1} parent=1 // pred_check
      _
    $region39: #{tpu_custom_call.1} parent=1 // pred_check_branch
      %821 = sbr.rel (0) target = $region41
    $region40: #{tpu_custom_call.1} parent=1 // pred_region
      %823 = dma.done [#allocation4], 256
    $region41: #{tpu_custom_call.1} parent=1 // pred_fallthru
      _
    %824 = vsyncpa [#allocation3], 1
    %825 = vsyncpa [#allocation6], 1
    %826 = vsyncpa [#allocation4], 1

</llo_original>
